<compile_context>
chip_gen: v7x
topology: tpu7x:2x2x1
jax: 0.10.0
libtpu: 0.0.40
codegen_flags: <defaults>
</compile_context>

<pallas_src>
from functools import partial

import jax
import jax.numpy as jnp
from jax.experimental import pallas as pl
from jax.experimental.pallas import tpu as pltpu

_NEG_LARGE = -1e30  # mask value for padded class lanes (exp underflows to 0)


def _round_up(x, m):
    return (x + m - 1) // m * m


# ----------------------------------------------------------------------------
# kernels
# ----------------------------------------------------------------------------
def head_kernel(x_ref, w_ref, b_ref, o_ref):
    """Resident-W path: one MXU matmul + fused softmax per batch tile."""
    logits = jnp.dot(
        x_ref[...], w_ref[...], preferred_element_type=jnp.float32
    ) + b_ref[...]                                   # [TM, C_pad] f32
    m = jnp.max(logits, axis=-1, keepdims=True)      # numerically stable softmax
    e = jnp.exp(logits - m)
    denom = jnp.sum(e, axis=-1, keepdims=True)
    o_ref[...] = (e * pl.reciprocal(denom, approx=True)).astype(o_ref.dtype)


def head_kernel_ktiled(x_ref, w_ref, b_ref, o_ref, acc_ref):
    """Streamed-W path: accumulate over K tiles, softmax epilogue on last K step."""
    k = pl.program_id(1)

    @pl.when(k == 0)
    def _():
        acc_ref[...] = jnp.zeros_like(acc_ref)

    acc_ref[...] += jnp.dot(
        x_ref[...], w_ref[...], preferred_element_type=jnp.float32
    )

    @pl.when(k == pl.num_programs(1) - 1)
    def _():
        logits = acc_ref[...] + b_ref[...]
        m = jnp.max(logits, axis=-1, keepdims=True)
        e = jnp.exp(logits - m)
        denom = jnp.sum(e, axis=-1, keepdims=True)
        o_ref[...] = (e * pl.reciprocal(denom, approx=True)).astype(o_ref.dtype)


# ----------------------------------------------------------------------------
# parameter prep (one-time; hoisted out of the per-call forward)
# ----------------------------------------------------------------------------
def prepare_head_params(w, b, *, pad_to=None, param_dtype=None):
    """Pad the class axis of W [dim, C] / b [C] to a lane/MXU-friendly width.

    Padded bias lanes are -1e30 so they contribute nothing to the softmax.
    param_dtype (e.g. jnp.bfloat16) optionally down-casts W for v5e/v6e HBM/MXU
    savings; the kernel still accumulates in f32.
    """
    dim, C = w.shape
    if pad_to is None:
        pad_to = 128 if C <= 128 else 256   # full 2x256 MXU pass on v6e/v7x
    C_pad = _round_up(max(C, 128), pad_to)
    if C_pad != C:
        w = jnp.pad(w, ((0, 0), (0, C_pad - C)))
        b = jnp.pad(b, (0, C_pad - C), constant_values=_NEG_LARGE)
    if param_dtype is not None:
        w = w.astype(param_dtype)
    b2 = b.reshape(1, C_pad).astype(jnp.float32)
    return w, b2, C


# ----------------------------------------------------------------------------
# tiling helpers
# ----------------------------------------------------------------------------
def _pick_tm(B8, tm_max):
    """Largest multiple-of-8 divisor of B8 that keeps the batch grid >= 2 steps."""
    if B8 <= 8:
        return B8
    cap = min(tm_max, max(8, (B8 // 2) // 8 * 8))
    t = (cap // 8) * 8
    while t > 8:
        if B8 % t == 0:
            return t
        t -= 8
    return 8


def _pick_tk(dim):
    """Lane-aligned K tile that divides dim (None -> K-tiling not possible)."""
    for tk in (512, 384, 256, 128):
        if dim % tk == 0 and dim // tk >= 2:
            return tk
    return None


def _vmem_hard_cap():
    """~85% of physical per-core VMEM (never the full physical capacity)."""
    try:
        cap = int(pltpu.get_tpu_info().vmem_capacity_bytes)
    except Exception:
        cap = 64 << 20        # conservative: v7x per-TC VMEM
    return int(cap * 0.85)


# ----------------------------------------------------------------------------
# pallas_call wrapper
# ----------------------------------------------------------------------------
def _pallas_head(x, w, b2, *, TM, C_pad, use_kt, tk, vmem_limit, single_buffer):
    B_pad, dim = x.shape
    out_dtype = x.dtype
    x_item = jnp.dtype(x.dtype).itemsize
    w_item = jnp.dtype(w.dtype).itemsize
    o_item = jnp.dtype(out_dtype).itemsize

    cost = pl.CostEstimate(
        flops=2 * B_pad * dim * C_pad,
        transcendentals=B_pad * C_pad,
        bytes_accessed=(B_pad * dim * x_item + dim * C_pad * w_item
                        + C_pad * 4 + B_pad * C_pad * o_item),
    )

    # Constant-index blocks are fetched exactly once -> single buffer.
    const_kwargs = dict(pipeline_mode=pl.Buffered(1)) if single_buffer else {}

    if use_kt:
        grid = (B_pad // TM, dim // tk)
        kern = head_kernel_ktiled
        in_specs = [
            pl.BlockSpec((TM, tk), lambda i, k: (i, k)),                    # x tile
            pl.BlockSpec((tk, C_pad), lambda i, k: (k, 0)),                 # W stream
            pl.BlockSpec((1, C_pad), lambda i, k: (0, 0), **const_kwargs),  # bias
        ]
        out_specs = pl.BlockSpec((TM, C_pad), lambda i, k: (i, 0))
        scratch = [pltpu.VMEM((TM, C_pad), jnp.float32)]
        semantics = ("parallel", "arbitrary")
    else:
        grid = (B_pad // TM,)
        kern = head_kernel
        in_specs = [
            pl.BlockSpec((TM, dim), lambda i: (i, 0)),                      # x tile
            pl.BlockSpec((dim, C_pad), lambda i: (0, 0), **const_kwargs),   # W resident
            pl.BlockSpec((1, C_pad), lambda i: (0, 0), **const_kwargs),     # bias
        ]
        out_specs = pl.BlockSpec((TM, C_pad), lambda i: (i, 0))
        scratch = []
        semantics = ("parallel",)

    return pl.pallas_call(
        kern,
        out_shape=jax.ShapeDtypeStruct((B_pad, C_pad), out_dtype),
        grid_spec=pltpu.PrefetchScalarGridSpec(
            num_scalar_prefetch=0,
            grid=grid,
            in_specs=in_specs,
            out_specs=out_specs,
            scratch_shapes=scratch,
        ),
        compiler_params=pltpu.CompilerParams(
            dimension_semantics=semantics,
            vmem_limit_bytes=vmem_limit,
        ),
        cost_estimate=cost,
    )(x, w, b2)


def head_forward(x, w_pad, b2, num_classes, *, tm=512, force_ktile=None):
    """x: [B, dim]; w_pad: [dim, C_pad]; b2: [1, C_pad] f32 (from prepare_head_params)."""
    B, dim = x.shape
    C_pad = w_pad.shape[1]
    out_dtype = x.dtype
    x_item = jnp.dtype(x.dtype).itemsize
    w_item = jnp.dtype(w_pad.dtype).itemsize
    o_item = jnp.dtype(out_dtype).itemsize

    B8 = _round_up(B, 8)
    TM = _pick_tm(B8, tm)
    tk = _pick_tk(dim)
    hard_cap = _vmem_hard_cap()
    margin = 4 << 20                         # Mosaic internal-scratch headroom

    def vmem_needed(tm_, ktile):
        x_b = 2 * tm_ * (tk if ktile else dim) * x_item
        o_b = 2 * tm_ * C_pad * o_item
        if ktile:
            w_b = 2 * tk * C_pad * w_item    # streamed, double-buffered
            acc_b = tm_ * C_pad * 4
        else:
            w_b = dim * C_pad * w_item       # resident, single-buffered
            acc_b = 0
        return x_b + o_b + w_b + acc_b + 2 * C_pad * 4

    if force_ktile is not None:
        use_kt = bool(force_ktile) and tk is not None
    else:
        # Stream W when it is big enough that an exposed prologue DMA hurts.
        use_kt = (tk is not None) and (dim * C_pad * w_item > (4 << 20))
    # Graceful fallback: if resident W does not fit the VMEM budget, stream it.
    if not use_kt and tk is not None and vmem_needed(TM, False) + margin > hard_cap:
        use_kt = True
    # Shrink the batch tile until the layout fits (instead of silently clamping).
    while TM > 8 and vmem_needed(TM, use_kt) + margin > hard_cap:
        TM = max(8, (TM // 2) // 8 * 8)

    B_pad = _round_up(B8, TM)
    if B_pad != B:
        x = jnp.pad(x, ((0, B_pad - B), (0, 0)))

    call = partial(_pallas_head, x, w_pad, b2, TM=TM, C_pad=C_pad,
                   use_kt=use_kt, tk=tk, vmem_limit=hard_cap)
    try:
        out = call(single_buffer=True)
    except Exception:
        # pl.Buffered(1) not accepted by this jax build -> default buffering.
        out = call(single_buffer=False)

    return out[:B, :num_classes]


# ----------------------------------------------------------------------------
if __name__ == "__main__":
    key = jax.random.PRNGKey(0)
    k_x, k_w, k_b, k_x2, k_w2, k_b2 = jax.random.split(key, 6)
    HI = jax.lax.Precision.HIGHEST

    # --- case 1: spec-sized small head (resident-W path) ---------------------
    B, dim, C = 8, 32, 16
    x = jax.random.normal(k_x, (B, dim), dtype=jnp.float32)
    bound = 1.0 / (dim ** 0.5)
    w_t = jax.random.uniform(k_w, (dim, C), minval=-bound, maxval=bound, dtype=jnp.float32)
    b = jax.random.uniform(k_b, (C,), minval=-bound, maxval=bound, dtype=jnp.float32)

    w_pad, b2, _ = prepare_head_params(w_t, b)               # one-time prep
    out = jax.block_until_ready(head_forward(x, w_pad, b2, C))
    ref = jax.nn.softmax(jnp.dot(x, w_t, precision=HI) + b[None, :], axis=-1)
    assert out.shape == (B, C)
    assert jnp.allclose(out, ref, atol=2e-3, rtol=2e-3), "case 1 mismatch vs reference"

    # --- case 2: larger head, K-tiled (streamed W) + multi-step batch grid ---
    B2, dim2, C2 = 32, 256, 200
    x2 = jax.random.normal(k_x2, (B2, dim2), dtype=jnp.float32)
    bound2 = 1.0 / (dim2 ** 0.5)
    w2 = jax.random.uniform(k_w2, (dim2, C2), minval=-bound2, maxval=bound2, dtype=jnp.float32)
    bb2 = jax.random.uniform(k_b2, (C2,), minval=-bound2, maxval=bound2, dtype=jnp.float32)

    w2_pad, b2_pad, _ = prepare_head_params(w2, bb2)
    out2 = jax.block_until_ready(head_forward(x2, w2_pad, b2_pad, C2, force_ktile=True))
    ref2 = jax.nn.softmax(jnp.dot(x2, w2, precision=HI) + bb2[None, :], axis=-1)
    assert out2.shape == (B2, C2)
    assert jnp.allclose(out2, ref2, atol=2e-3, rtol=2e-3), "case 2 mismatch vs reference"

    # TODO(synk): dropout with rate > 0 in training mode is not implemented
    # (module default is rate=0.0 -> Identity, and eval-mode forward is what we match).
    print("KERNEL_OK")
</pallas_src>

<mosaic_0001>
module attributes {stable_mosaic.version = 11 : i64} {
  func.func @head_kernel(%arg0: i32, %arg1: memref<8x32xf32, #tpu.memory_space<vmem>>, %arg2: memref<32x128xf32, #tpu.memory_space<vmem>>, %arg3: memref<1x128xf32, #tpu.memory_space<vmem>>, %arg4: memref<8x128xf32, #tpu.memory_space<vmem>>) attributes {dimension_semantics = [#tpu.dimension_semantics<parallel>], iteration_bounds = array<i64: 1>, scalar_prefetch = 0 : i64, scratch_operands = 0 : i64, tpu.core_type = #tpu.core_type<tc>, window_params = [{transform_indices = @transform_0, window_bounds = array<i64: 8, 32>}, {pipeline_mode = #tpu.pipeline_mode<synchronous>, transform_indices = @transform_1, window_bounds = array<i64: 32, 128>}, {pipeline_mode = #tpu.pipeline_mode<synchronous>, transform_indices = @transform_2, window_bounds = array<i64: 1, 128>}, {transform_indices = @transform_3, window_bounds = array<i64: 8, 128>}]} {
    %c0 = arith.constant 0 : index
    %c0_0 = arith.constant 0 : index
    %0 = vector.load %arg1[%c0, %c0_0] : memref<8x32xf32, #tpu.memory_space<vmem>>, vector<8x32xf32>
    %c0_1 = arith.constant 0 : index
    %c0_2 = arith.constant 0 : index
    %1 = vector.load %arg2[%c0_1, %c0_2] : memref<32x128xf32, #tpu.memory_space<vmem>>, vector<32x128xf32>
    %cst = arith.constant dense<0.000000e+00> : vector<8x128xf32>
    %2 = tpu.matmul %0, %1, %cst {dimension_numbers = #tpu.dot_dimension_numbers<[1], [0], [0], [1], [0, 0, 1, 1], [], []>} : vector<8x32xf32>, vector<32x128xf32>, vector<8x128xf32> -> vector<8x128xf32>
    %c0_3 = arith.constant 0 : index
    %c0_4 = arith.constant 0 : index
    %3 = vector.load %arg3[%c0_3, %c0_4] : memref<1x128xf32, #tpu.memory_space<vmem>>, vector<1x128xf32>
    %4 = vector.broadcast %3 : vector<1x128xf32> to vector<8x128xf32>
    %5 = arith.addf %2, %4 : vector<8x128xf32>
    %cst_5 = arith.constant dense<0xFF800000> : vector<8xf32>
    %6 = vector.multi_reduction <maximumf>, %5, %cst_5 [1] : vector<8x128xf32> to vector<8xf32>
    %7 = vector.shape_cast %6 : vector<8xf32> to vector<8x1xf32>
    %8 = vector.broadcast %7 : vector<8x1xf32> to vector<8x128xf32>
    %9 = arith.subf %5, %8 : vector<8x128xf32>
    %10 = math.exp %9 : vector<8x128xf32>
    %cst_6 = arith.constant dense<0.000000e+00> : vector<8xf32>
    %11 = vector.multi_reduction <add>, %10, %cst_6 [1] : vector<8x128xf32> to vector<8xf32>
    %12 = vector.shape_cast %11 : vector<8xf32> to vector<8x1xf32>
    %13 = tpu.reciprocal %12 {approx = true} : vector<8x1xf32> -> vector<8x1xf32>
    %14 = vector.broadcast %13 : vector<8x1xf32> to vector<8x128xf32>
    %15 = arith.mulf %10, %14 : vector<8x128xf32>
    %c0_7 = arith.constant 0 : index
    %c0_8 = arith.constant 0 : index
    %16 = vector.load %arg4[%c0_7, %c0_8] : memref<8x128xf32, #tpu.memory_space<vmem>>, vector<8x128xf32>
    tpu.vector_store %arg4[%c0_7, %c0_8], %15 {strides = array<i32>} : memref<8x128xf32, #tpu.memory_space<vmem>>, vector<8x128xf32>,
    return
  }
  func.func @transform_0(%arg0: i32) -> (i32, i32) {
    %c0_i32 = arith.constant 0 : i32
    %c0_i32_0 = arith.constant 0 : i32
    return %arg0, %c0_i32 : i32, i32
  }
  func.func @transform_1(%arg0: i32) -> (i32, i32) {
    %c0_i32 = arith.constant 0 : i32
    %c0_i32_0 = arith.constant 0 : i32
    %c0_i32_1 = arith.constant 0 : i32
    return %c0_i32, %c0_i32_0 : i32, i32
  }
  func.func @transform_2(%arg0: i32) -> (i32, i32) {
    %c0_i32 = arith.constant 0 : i32
    %c0_i32_0 = arith.constant 0 : i32
    %c0_i32_1 = arith.constant 0 : i32
    return %c0_i32, %c0_i32_0 : i32, i32
  }
  func.func @transform_3(%arg0: i32) -> (i32, i32) {
    %c0_i32 = arith.constant 0 : i32
    %c0_i32_0 = arith.constant 0 : i32
    return %arg0, %c0_i32 : i32, i32
  }
}

module attributes {stable_mosaic.version = 11 : i64} {
  func.func @head_kernel(%arg0: i32, %arg1: memref<8x32xf32, #tpu.memory_space<vmem>>, %arg2: memref<32x128xf32, #tpu.memory_space<vmem>>, %arg3: memref<1x128xf32, #tpu.memory_space<vmem>>, %arg4: memref<8x128xf32, #tpu.memory_space<vmem>>) attributes {dimension_semantics = [#tpu.dimension_semantics<parallel>], iteration_bounds = array<i64: 1>, scalar_prefetch = 0 : i64, scratch_operands = 0 : i64, tpu.core_type = #tpu.core_type<tc>, window_params = [{transform_indices = @transform_0, window_bounds = array<i64: 8, 32>}, {pipeline_mode = #tpu.pipeline_mode<synchronous>, transform_indices = @transform_1, window_bounds = array<i64: 32, 128>}, {pipeline_mode = #tpu.pipeline_mode<synchronous>, transform_indices = @transform_2, window_bounds = array<i64: 1, 128>}, {transform_indices = @transform_3, window_bounds = array<i64: 8, 128>}]} {
    %c0 = arith.constant 0 : index
    %c0_0 = arith.constant 0 : index
    %0 = vector.load %arg1[%c0, %c0_0] : memref<8x32xf32, #tpu.memory_space<vmem>>, vector<8x32xf32>
    %c0_1 = arith.constant 0 : index
    %c0_2 = arith.constant 0 : index
    %1 = vector.load %arg2[%c0_1, %c0_2] : memref<32x128xf32, #tpu.memory_space<vmem>>, vector<32x128xf32>
    %cst = arith.constant dense<0.000000e+00> : vector<8x128xf32>
    %2 = tpu.matmul %0, %1, %cst {dimension_numbers = #tpu.dot_dimension_numbers<[1], [0], [0], [1], [0, 0, 1, 1], [], []>} : vector<8x32xf32>, vector<32x128xf32>, vector<8x128xf32> -> vector<8x128xf32>
    %c0_3 = arith.constant 0 : index
    %c0_4 = arith.constant 0 : index
    %3 = vector.load %arg3[%c0_3, %c0_4] : memref<1x128xf32, #tpu.memory_space<vmem>>, vector<1x128xf32>
    %4 = vector.broadcast %3 : vector<1x128xf32> to vector<8x128xf32>
    %5 = arith.addf %2, %4 : vector<8x128xf32>
    %cst_5 = arith.constant dense<0xFF800000> : vector<8xf32>
    %6 = vector.multi_reduction <maximumf>, %5, %cst_5 [1] : vector<8x128xf32> to vector<8xf32>
    %7 = vector.shape_cast %6 : vector<8xf32> to vector<8x1xf32>
    %8 = vector.broadcast %7 : vector<8x1xf32> to vector<8x128xf32>
    %9 = arith.subf %5, %8 : vector<8x128xf32>
    %10 = math.exp %9 : vector<8x128xf32>
    %cst_6 = arith.constant dense<0.000000e+00> : vector<8xf32>
    %11 = vector.multi_reduction <add>, %10, %cst_6 [1] : vector<8x128xf32> to vector<8xf32>
    %12 = vector.shape_cast %11 : vector<8xf32> to vector<8x1xf32>
    %13 = tpu.reciprocal %12 {approx = true} : vector<8x1xf32> -> vector<8x1xf32>
    %14 = vector.broadcast %13 : vector<8x1xf32> to vector<8x128xf32>
    %15 = arith.mulf %10, %14 : vector<8x128xf32>
    %c0_7 = arith.constant 0 : index
    %c0_8 = arith.constant 0 : index
    %16 = vector.load %arg4[%c0_7, %c0_8] : memref<8x128xf32, #tpu.memory_space<vmem>>, vector<8x128xf32>
    tpu.vector_store %arg4[%c0_7, %c0_8], %15 {strides = array<i32>} : memref<8x128xf32, #tpu.memory_space<vmem>>, vector<8x128xf32>,
    return
  }
  func.func @transform_0(%arg0: i32) -> (i32, i32) {
    %c0_i32 = arith.constant 0 : i32
    %c0_i32_0 = arith.constant 0 : i32
    return %arg0, %c0_i32 : i32, i32
  }
  func.func @transform_1(%arg0: i32) -> (i32, i32) {
    %c0_i32 = arith.constant 0 : i32
    %c0_i32_0 = arith.constant 0 : i32
    %c0_i32_1 = arith.constant 0 : i32
    return %c0_i32, %c0_i32_0 : i32, i32
  }
  func.func @transform_2(%arg0: i32) -> (i32, i32) {
    %c0_i32 = arith.constant 0 : i32
    %c0_i32_0 = arith.constant 0 : i32
    %c0_i32_1 = arith.constant 0 : i32
    return %c0_i32, %c0_i32_0 : i32, i32
  }
  func.func @transform_3(%arg0: i32) -> (i32, i32) {
    %c0_i32 = arith.constant 0 : i32
    %c0_i32_0 = arith.constant 0 : i32
    return %arg0, %c0_i32 : i32, i32
  }
}

</mosaic_0001>

<llo_original>
// kernel: tpu_custom_call.1
$region0: #{tpu_custom_call.1}
  #allocation0 [shape = 'u32[]', space=smem, size = 0x4, offset = 0x4, fixed_abs, tag = 'smem constant byte address 0x4 - core index']
  #allocation1 [shape = 'u32[144,128]{1,0:T(1,128)}', space=vmem, size = 0x12000, scoped, tag = 'internal scratch']
  %s0 = inlined_call_operand.hbm [shape: f32[8,32], index: 0, kind: input, shape index: {}]
  %s1 = inlined_call_operand.hbm [shape: f32[32,128], index: 1, kind: input, shape index: {}]
  %s2 = inlined_call_operand.vmem [shape: f32[1,128], index: 2, kind: input, shape index: {}]
  %s3 = inlined_call_operand.hbm [shape: f32[8,128], index: 3, kind: output, shape index: {}]
  %s4 = sld [smem:[#allocation0]]
  $region30: #{tpu_custom_call.1} parent=0
    _
  %s6 = ssub.s32 1, %s4
  %s7 = scalar_select 0, %s6, %s4
  $region1: #{tpu_custom_call.1} parent=0
    #allocation2 [shape = 'u8[4096]{0}', space=vmem, size = 0x1000, scoped, tag = 'input window, operand 0, single buffered']
    #allocation3 [shape = 's32[1]{0}', space=sflag, size = 0x4, scoped, tag = 'scoped memory for tpu_custom_call.1']
    #allocation4 [shape = 's32[1]{0}', space=sflag, size = 0x4, scoped, tag = 'scoped memory for tpu_custom_call.1']
    #allocation5 [shape = 'u8[16384]{0}', space=vmem, size = 0x4000, scoped, tag = 'input window, operand 1, single buffered']
    #allocation6 [shape = 's32[1]{0}', space=sflag, size = 0x4, scoped, tag = 'scoped memory for tpu_custom_call.1']
    #allocation7 [shape = 'u8[4096]{0}', space=vmem, size = 0x1000, scoped, tag = 'output window, operand 0, single buffered']
    %8 = vsyncpa [#allocation3], 0
    %9 = vsyncpa [#allocation6], 0
    %10 = vsyncpa [#allocation4], 0
    // Predicated region
    $region2: #{tpu_custom_call.1} parent=1 // pred_check
      _
    $region3: #{tpu_custom_call.1} parent=1 // pred_check_branch
      %12 = sbr.rel (0) target = $region5
    $region4: #{tpu_custom_call.1} parent=1 // pred_region
      %s14 = ssub.s32 128, 128
      %15 = vsyncadd [#allocation3], %s14
      %s17 = sshll.u32 [#allocation2], 4
      %s18 = int_to_ptr.vmem [resolvable:$true] %s17
      %20 = dma.hbm_to_vmem [thread:$0]  %s0, 128, %s18, [#allocation3]
    $region5: #{tpu_custom_call.1} parent=1 // pred_fallthru
      _
    // Predicated region
    $region6: #{tpu_custom_call.1} parent=1 // pred_check
      _
    $region7: #{tpu_custom_call.1} parent=1 // pred_check_branch
      %22 = sbr.rel (0) target = $region9
    $region8: #{tpu_custom_call.1} parent=1 // pred_region
      %s24 = ssub.s32 512, 512
      %25 = vsyncadd [#allocation6], %s24
      %s26 = sshll.u32 [#allocation5], 4
      %s27 = int_to_ptr.vmem [resolvable:$true] %s26
      %32 = dma.hbm_to_vmem [thread:$0]  %s1, 512, %s27, [#allocation6], 128, 128, 8
    $region9: #{tpu_custom_call.1} parent=1 // pred_fallthru
      _
    // Predicated region
    $region10: #{tpu_custom_call.1} parent=1 // pred_check
      _
    $region11: #{tpu_custom_call.1} parent=1 // pred_check_branch
      %34 = sbr.rel (0) target = $region13
    $region12: #{tpu_custom_call.1} parent=1 // pred_region
      _
    $region13: #{tpu_custom_call.1} parent=1 // pred_fallthru
      _
    // Predicated region
    $region14: #{tpu_custom_call.1} parent=1 // pred_check
      _
    $region15: #{tpu_custom_call.1} parent=1 // pred_check_branch
      %36 = sbr.rel (0) target = $region17
    $region16: #{tpu_custom_call.1} parent=1 // pred_region
      %37 = dma.done [#allocation3], 128
    $region17: #{tpu_custom_call.1} parent=1 // pred_fallthru
      _
    // Predicated region
    $region18: #{tpu_custom_call.1} parent=1 // pred_check
      _
    $region19: #{tpu_custom_call.1} parent=1 // pred_check_branch
      %39 = sbr.rel (0) target = $region21
    $region20: #{tpu_custom_call.1} parent=1 // pred_region
      %40 = dma.done [#allocation6], 512
    $region21: #{tpu_custom_call.1} parent=1 // pred_fallthru
      _
    %v41 = vld [vmem:[#allocation2] sm:$0xff]
    %v42 = vld [vmem:[#allocation5] sm:$0xff]
    %v43 = vld [vmem:[#allocation5 + $0x8] sm:$0xff]
    %v44 = vld [vmem:[#allocation5 + $0x10] sm:$0xff]
    %v45 = vld [vmem:[#allocation5 + $0x18] sm:$0xff]
    %v46 = vld [vmem:[%s2] sm:$0x1]
    %v48 = vlaneseq
    %v49 = vshrl.u32 %v48, 7
    %v50 = vsub.s32 0, %v49
    %v51 = vrot.slane %v46, %v50
    %vm53 = vcmask 261120
    %v55 = vsel %vm53, %v41, 0
    %57 = vmatprep.subr.mxu0 0.0
    %58 = vmatpush1.msra.mxu0 %v42
    %59 = vmatprep.subr.mxu0 0.0
    %60 = vmatpush1.msra.mxu0 %v43
    %61 = vmatprep.subr.mxu0 0.0
    %62 = vmatpush1.msra.mxu0 %v44
    %63 = vmatprep.subr.mxu0 0.0
    %64 = vmatpush1.msra.mxu0 %v45
    %65 = vmatprep.subr.mxu0 0.0
    %66 = vmatpush1.msra.mxu0 0.0
    %67 = vmatprep.subr.mxu0 0.0
    %68 = vmatpush1.msra.mxu0 0.0
    %69 = vmatprep.subr.mxu0 0.0
    %70 = vmatpush1.msra.mxu0 0.0
    %71 = vmatprep.subr.mxu0 0.0
    %72 = vmatpush1.msra.mxu0 0.0
    %73 = vmatprep.subr.mxu0 0.0
    %74 = vmatpush1.msra.mxu0 0.0
    %75 = vmatprep.subr.mxu0 0.0
    %76 = vmatpush1.msra.mxu0 0.0
    %77 = vmatprep.subr.mxu0 0.0
    %78 = vmatpush1.msra.mxu0 0.0
    %79 = vmatprep.subr.mxu0 0.0
    %80 = vmatpush1.msra.mxu0 0.0
    %81 = vmatprep.subr.mxu0 0.0
    %82 = vmatpush1.msra.mxu0 0.0
    %83 = vmatprep.subr.mxu0 0.0
    %84 = vmatpush1.msra.mxu0 0.0
    %85 = vmatprep.subr.mxu0 0.0
    %86 = vmatpush1.msra.mxu0 0.0
    %87 = vmatprep.subr.mxu0 0.0
    %88 = vmatpush1.msra.mxu0 0.0
    %89 = vmatprep.subr.mxu0 0.0
    %90 = vmatpush1.msra.mxu0 0.0
    %91 = vmatprep.subr.mxu0 0.0
    %92 = vmatpush1.msra.mxu0 0.0
    %93 = vmatprep.subr.mxu0 0.0
    %94 = vmatpush1.msra.mxu0 0.0
    %95 = vmatprep.subr.mxu0 0.0
    %96 = vmatpush1.msra.mxu0 0.0
    %97 = vmatprep.subr.mxu0 0.0
    %98 = vmatpush1.msra.mxu0 0.0
    %99 = vmatprep.subr.mxu0 0.0
    %100 = vmatpush1.msra.mxu0 0.0
    %101 = vmatprep.subr.mxu0 0.0
    %102 = vmatpush1.msra.mxu0 0.0
    %103 = vmatprep.subr.mxu0 0.0
    %104 = vmatpush1.msra.mxu0 0.0
    %105 = vmatprep.subr.mxu0 0.0
    %106 = vmatpush1.msra.mxu0 0.0
    %107 = vmatprep.subr.mxu0 0.0
    %108 = vmatpush1.msra.mxu0 0.0
    %109 = vmatprep.subr.mxu0 0.0
    %110 = vmatpush1.msra.mxu0 0.0
    %111 = vmatprep.subr.mxu0 0.0
    %112 = vmatpush1.msra.mxu0 0.0
    %113 = vmatprep.subr.mxu0 0.0
    %114 = vmatpush1.msra.mxu0 0.0
    %115 = vmatprep.subr.mxu0 0.0
    %116 = vmatpush1.msra.mxu0 0.0
    %117 = vmatprep.subr.mxu0 0.0
    %118 = vmatpush1.msra.mxu0 0.0
    %119 = vmatprep.subr.mxu0 0.0
    %120 = vmatpush1.msra.mxu0 0.0
    %121 = vmatprep.mubr.f32.mxu0 0.0
    %122 = vmatmul.mubr.f32.gmra.mrb[0].mxu0 %v55
    %v123 = vpop.f32.mrb[0].mxu0
    %v124 = vadd.f32 %v51, %v123
    %v125 = vpop.f32.mrb[0].mxu0
    %126 = vdwg.mxu0
    %127 = vmax.xlane.f32.xlu0 %v124
    %v128 = vpop.xlane.xlu0 %127
    %v129 = vsub.f32 %v124, %v128
    %v130 = vmul.f32 %v129, 1.442695
    %v131 = vpow.pop %v130
    %132 = vadd.xlane.f32.xlu0 %v131
    %v133 = vpop.xlane.xlu0 %132
    %v134 = vrcp.pop %v133
    %v135 = vmul.f32 %v131, %v134
    %136 = vst [vmem:[#allocation7] sm:$0xff] %v135
    // Predicated region
    $region22: #{tpu_custom_call.1} parent=1 // pred_check
      _
    $region23: #{tpu_custom_call.1} parent=1 // pred_check_branch
      %138 = sbr.rel (0) target = $region25
    $region24: #{tpu_custom_call.1} parent=1 // pred_region
      %s140 = ssub.s32 128, 128
      %141 = vsyncadd [#allocation4], %s140
      %s143 = sshll.u32 [#allocation7], 4
      %s144 = int_to_ptr.vmem [resolvable:$true] %s143
      %146 = dma.vmem_to_hbm [thread:$0]  %s144, 128, %s3, [#allocation4]
    $region25: #{tpu_custom_call.1} parent=1 // pred_fallthru
      _
    // Predicated region
    $region26: #{tpu_custom_call.1} parent=1 // pred_check
      _
    $region27: #{tpu_custom_call.1} parent=1 // pred_check_branch
      %148 = sbr.rel (0) target = $region29
    $region28: #{tpu_custom_call.1} parent=1 // pred_region
      %149 = dma.done [#allocation4], 128
    $region29: #{tpu_custom_call.1} parent=1 // pred_fallthru
      _
    %150 = vsyncpa [#allocation3], 1
    %151 = vsyncpa [#allocation6], 1
    %152 = vsyncpa [#allocation4], 1

// kernel: tpu_custom_call.1
$region0: #{tpu_custom_call.1}
  #allocation0 [shape = 'u32[]', space=smem, size = 0x4, offset = 0x4, fixed_abs, tag = 'smem constant byte address 0x4 - core index']
  #allocation1 [shape = 'u32[144,128]{1,0:T(1,128)}', space=vmem, size = 0x12000, scoped, tag = 'internal scratch']
  %s0 = inlined_call_operand.hbm [shape: f32[8,32], index: 0, kind: input, shape index: {}]
  %s1 = inlined_call_operand.hbm [shape: f32[32,128], index: 1, kind: input, shape index: {}]
  %s2 = inlined_call_operand.vmem [shape: f32[1,128], index: 2, kind: input, shape index: {}]
  %s3 = inlined_call_operand.hbm [shape: f32[8,128], index: 3, kind: output, shape index: {}]
  %s4 = sld [smem:[#allocation0]]
  $region30: #{tpu_custom_call.1} parent=0
    _
  %s6 = ssub.s32 1, %s4
  %s7 = scalar_select 0, %s6, %s4
  $region1: #{tpu_custom_call.1} parent=0
    #allocation2 [shape = 'u8[4096]{0}', space=vmem, size = 0x1000, scoped, tag = 'input window, operand 0, single buffered']
    #allocation3 [shape = 's32[1]{0}', space=sflag, size = 0x4, scoped, tag = 'scoped memory for tpu_custom_call.1']
    #allocation4 [shape = 's32[1]{0}', space=sflag, size = 0x4, scoped, tag = 'scoped memory for tpu_custom_call.1']
    #allocation5 [shape = 'u8[16384]{0}', space=vmem, size = 0x4000, scoped, tag = 'input window, operand 1, single buffered']
    #allocation6 [shape = 's32[1]{0}', space=sflag, size = 0x4, scoped, tag = 'scoped memory for tpu_custom_call.1']
    #allocation7 [shape = 'u8[4096]{0}', space=vmem, size = 0x1000, scoped, tag = 'output window, operand 0, single buffered']
    %8 = vsyncpa [#allocation3], 0
    %9 = vsyncpa [#allocation6], 0
    %10 = vsyncpa [#allocation4], 0
    // Predicated region
    $region2: #{tpu_custom_call.1} parent=1 // pred_check
      _
    $region3: #{tpu_custom_call.1} parent=1 // pred_check_branch
      %12 = sbr.rel (0) target = $region5
    $region4: #{tpu_custom_call.1} parent=1 // pred_region
      %s14 = ssub.s32 128, 128
      %15 = vsyncadd [#allocation3], %s14
      %s17 = sshll.u32 [#allocation2], 4
      %s18 = int_to_ptr.vmem [resolvable:$true] %s17
      %20 = dma.hbm_to_vmem [thread:$0]  %s0, 128, %s18, [#allocation3]
    $region5: #{tpu_custom_call.1} parent=1 // pred_fallthru
      _
    // Predicated region
    $region6: #{tpu_custom_call.1} parent=1 // pred_check
      _
    $region7: #{tpu_custom_call.1} parent=1 // pred_check_branch
      %22 = sbr.rel (0) target = $region9
    $region8: #{tpu_custom_call.1} parent=1 // pred_region
      %s24 = ssub.s32 512, 512
      %25 = vsyncadd [#allocation6], %s24
      %s26 = sshll.u32 [#allocation5], 4
      %s27 = int_to_ptr.vmem [resolvable:$true] %s26
      %32 = dma.hbm_to_vmem [thread:$0]  %s1, 512, %s27, [#allocation6], 128, 128, 8
    $region9: #{tpu_custom_call.1} parent=1 // pred_fallthru
      _
    // Predicated region
    $region10: #{tpu_custom_call.1} parent=1 // pred_check
      _
    $region11: #{tpu_custom_call.1} parent=1 // pred_check_branch
      %34 = sbr.rel (0) target = $region13
    $region12: #{tpu_custom_call.1} parent=1 // pred_region
      _
    $region13: #{tpu_custom_call.1} parent=1 // pred_fallthru
      _
    // Predicated region
    $region14: #{tpu_custom_call.1} parent=1 // pred_check
      _
    $region15: #{tpu_custom_call.1} parent=1 // pred_check_branch
      %36 = sbr.rel (0) target = $region17
    $region16: #{tpu_custom_call.1} parent=1 // pred_region
      %37 = dma.done [#allocation3], 128
    $region17: #{tpu_custom_call.1} parent=1 // pred_fallthru
      _
    // Predicated region
    $region18: #{tpu_custom_call.1} parent=1 // pred_check
      _
    $region19: #{tpu_custom_call.1} parent=1 // pred_check_branch
      %39 = sbr.rel (0) target = $region21
    $region20: #{tpu_custom_call.1} parent=1 // pred_region
      %40 = dma.done [#allocation6], 512
    $region21: #{tpu_custom_call.1} parent=1 // pred_fallthru
      _
    %v41 = vld [vmem:[#allocation2] sm:$0xff]
    %v42 = vld [vmem:[#allocation5] sm:$0xff]
    %v43 = vld [vmem:[#allocation5 + $0x8] sm:$0xff]
    %v44 = vld [vmem:[#allocation5 + $0x10] sm:$0xff]
    %v45 = vld [vmem:[#allocation5 + $0x18] sm:$0xff]
    %v46 = vld [vmem:[%s2] sm:$0x1]
    %v48 = vlaneseq
    %v49 = vshrl.u32 %v48, 7
    %v50 = vsub.s32 0, %v49
    %v51 = vrot.slane %v46, %v50
    %vm53 = vcmask 261120
    %v55 = vsel %vm53, %v41, 0
    %57 = vmatprep.subr.mxu0 0.0
    %58 = vmatpush1.msra.mxu0 %v42
    %59 = vmatprep.subr.mxu0 0.0
    %60 = vmatpush1.msra.mxu0 %v43
    %61 = vmatprep.subr.mxu0 0.0
    %62 = vmatpush1.msra.mxu0 %v44
    %63 = vmatprep.subr.mxu0 0.0
    %64 = vmatpush1.msra.mxu0 %v45
    %65 = vmatprep.subr.mxu0 0.0
    %66 = vmatpush1.msra.mxu0 0.0
    %67 = vmatprep.subr.mxu0 0.0
    %68 = vmatpush1.msra.mxu0 0.0
    %69 = vmatprep.subr.mxu0 0.0
    %70 = vmatpush1.msra.mxu0 0.0
    %71 = vmatprep.subr.mxu0 0.0
    %72 = vmatpush1.msra.mxu0 0.0
    %73 = vmatprep.subr.mxu0 0.0
    %74 = vmatpush1.msra.mxu0 0.0
    %75 = vmatprep.subr.mxu0 0.0
    %76 = vmatpush1.msra.mxu0 0.0
    %77 = vmatprep.subr.mxu0 0.0
    %78 = vmatpush1.msra.mxu0 0.0
    %79 = vmatprep.subr.mxu0 0.0
    %80 = vmatpush1.msra.mxu0 0.0
    %81 = vmatprep.subr.mxu0 0.0
    %82 = vmatpush1.msra.mxu0 0.0
    %83 = vmatprep.subr.mxu0 0.0
    %84 = vmatpush1.msra.mxu0 0.0
    %85 = vmatprep.subr.mxu0 0.0
    %86 = vmatpush1.msra.mxu0 0.0
    %87 = vmatprep.subr.mxu0 0.0
    %88 = vmatpush1.msra.mxu0 0.0
    %89 = vmatprep.subr.mxu0 0.0
    %90 = vmatpush1.msra.mxu0 0.0
    %91 = vmatprep.subr.mxu0 0.0
    %92 = vmatpush1.msra.mxu0 0.0
    %93 = vmatprep.subr.mxu0 0.0
    %94 = vmatpush1.msra.mxu0 0.0
    %95 = vmatprep.subr.mxu0 0.0
    %96 = vmatpush1.msra.mxu0 0.0
    %97 = vmatprep.subr.mxu0 0.0
    %98 = vmatpush1.msra.mxu0 0.0
    %99 = vmatprep.subr.mxu0 0.0
    %100 = vmatpush1.msra.mxu0 0.0
    %101 = vmatprep.subr.mxu0 0.0
    %102 = vmatpush1.msra.mxu0 0.0
    %103 = vmatprep.subr.mxu0 0.0
    %104 = vmatpush1.msra.mxu0 0.0
    %105 = vmatprep.subr.mxu0 0.0
    %106 = vmatpush1.msra.mxu0 0.0
    %107 = vmatprep.subr.mxu0 0.0
    %108 = vmatpush1.msra.mxu0 0.0
    %109 = vmatprep.subr.mxu0 0.0
    %110 = vmatpush1.msra.mxu0 0.0
    %111 = vmatprep.subr.mxu0 0.0
    %112 = vmatpush1.msra.mxu0 0.0
    %113 = vmatprep.subr.mxu0 0.0
    %114 = vmatpush1.msra.mxu0 0.0
    %115 = vmatprep.subr.mxu0 0.0
    %116 = vmatpush1.msra.mxu0 0.0
    %117 = vmatprep.subr.mxu0 0.0
    %118 = vmatpush1.msra.mxu0 0.0
    %119 = vmatprep.subr.mxu0 0.0
    %120 = vmatpush1.msra.mxu0 0.0
    %121 = vmatprep.mubr.f32.mxu0 0.0
    %122 = vmatmul.mubr.f32.gmra.mrb[0].mxu0 %v55
    %v123 = vpop.f32.mrb[0].mxu0
    %v124 = vadd.f32 %v51, %v123
    %v125 = vpop.f32.mrb[0].mxu0
    %126 = vdwg.mxu0
    %127 = vmax.xlane.f32.xlu0 %v124
    %v128 = vpop.xlane.xlu0 %127
    %v129 = vsub.f32 %v124, %v128
    %v130 = vmul.f32 %v129, 1.442695
    %v131 = vpow.pop %v130
    %132 = vadd.xlane.f32.xlu0 %v131
    %v133 = vpop.xlane.xlu0 %132
    %v134 = vrcp.pop %v133
    %v135 = vmul.f32 %v131, %v134
    %136 = vst [vmem:[#allocation7] sm:$0xff] %v135
    // Predicated region
    $region22: #{tpu_custom_call.1} parent=1 // pred_check
      _
    $region23: #{tpu_custom_call.1} parent=1 // pred_check_branch
      %138 = sbr.rel (0) target = $region25
    $region24: #{tpu_custom_call.1} parent=1 // pred_region
      %s140 = ssub.s32 128, 128
      %141 = vsyncadd [#allocation4], %s140
      %s143 = sshll.u32 [#allocation7], 4
      %s144 = int_to_ptr.vmem [resolvable:$true] %s143
      %146 = dma.vmem_to_hbm [thread:$0]  %s144, 128, %s3, [#allocation4]
    $region25: #{tpu_custom_call.1} parent=1 // pred_fallthru
      _
    // Predicated region
    $region26: #{tpu_custom_call.1} parent=1 // pred_check
      _
    $region27: #{tpu_custom_call.1} parent=1 // pred_check_branch
      %148 = sbr.rel (0) target = $region29
    $region28: #{tpu_custom_call.1} parent=1 // pred_region
      %149 = dma.done [#allocation4], 128
    $region29: #{tpu_custom_call.1} parent=1 // pred_fallthru
      _
    %150 = vsyncpa [#allocation3], 1
    %151 = vsyncpa [#allocation6], 1
    %152 = vsyncpa [#allocation4], 1

</llo_original>
